<compile_context>
chip_gen: v7x
topology: tpu7x:2x2x1
jax: 0.10.0
libtpu: 0.0.40
codegen_flags: <defaults>
</compile_context>

<pallas_src>
import jax
import jax.numpy as jnp
from jax.experimental import pallas as pl
from jax.experimental.pallas import tpu as pltpu


def make_span_emo_kernel(TB, L, H):
    """Kernel for one batch tile of TB rows.

    Refs:
      x_ref      : (TB*L, H)  label-position embeddings (compute dtype)
      w1_ref     : (H, H)     FFN layer-1 weight        (compute dtype)
      b1_ref     : (1, H)     FFN layer-1 bias          (f32)
      w2_ref     : (1, H)     FFN layer-2 weight as a lane row (f32)
      b2_ref     : (1, 1)     FFN layer-2 bias          (f32)
      tgt_ref    : (TB, L)    targets                   (f32)
      logits_ref : (TB, L)    out: logits (lane-dense)
      ypred_ref  : (TB, L)    out: sigmoid(logits) > 0.5
      part_ref   : (TB, 2)    out: per-row [bce_sum, corr] loss partials
    """
    def kernel(x_ref, w1_ref, b1_ref, w2_ref, b2_ref, tgt_ref,
               logits_ref, ypred_ref, part_ref):
        # ---- FFN layer 1 on the MXU: (TB*L, H) @ (H, H), f32 accumulate ----
        h = jnp.tanh(
            jnp.dot(x_ref[...], w1_ref[...],
                    preferred_element_type=jnp.float32)
            + b1_ref[...])                                        # (TB*L, H) f32

        # ---- FFN layer 2 (H -> 1) as VPU multiply + lane reduce (no N=1 MXU
        # matmul); result is produced directly as a lane-dense (TB, L) tile ----
        hw = h * w2_ref[...]                                      # (TB*L, H)
        z = jnp.sum(hw.reshape(TB, L, H), axis=-1) + b2_ref[...]  # (TB, L)
        logits_ref[...] = z

        sig = jax.nn.sigmoid(z)
        ypred_ref[...] = (sig > 0.5).astype(jnp.float32)

        # ---- joint loss partials (final reduction happens in the wrapper,
        # keeping the batch grid axis parallel) ----
        t = tgt_ref[...]                                          # (TB, L)
        bce = jnp.maximum(z, 0.0) - z * t + jnp.log1p(jnp.exp(-jnp.abs(z)))
        part_ref[:, 0:1] = jnp.sum(bce, axis=-1, keepdims=True)   # per-row BCE sum

        ones_m = (t != 0.0).astype(jnp.float32)
        zeros_m = 1.0 - ones_m
        # sum_{i in zeros, j in ones} exp(sig_i - sig_j)
        #   = (sum_zeros exp(sig)) * (sum_ones exp(-sig))
        s_z = jnp.sum(zeros_m * jnp.exp(sig), axis=-1, keepdims=True)
        s_o = jnp.sum(ones_m * jnp.exp(-sig), axis=-1, keepdims=True)
        n_z = jnp.sum(zeros_m, axis=-1, keepdims=True)
        n_o = jnp.sum(ones_m, axis=-1, keepdims=True)
        corr = jnp.where(n_o > 0.0, (s_z * s_o) / (n_z * n_o),
                         jnp.zeros_like(s_z))
        part_ref[:, 1:2] = corr                                   # per-row corr

    return kernel


def _pick_batch_tile(B, L, max_rows=512):
    """Batch rows per grid step (keeps the matmul M-dim reasonably filled)."""
    if B * L <= max_rows:
        return B
    tb = 1
    for cand in range(1, B + 1):
        if B % cand == 0 and cand * L <= max_rows and cand % 8 == 0:
            tb = cand
    return tb


def span_emo_forward(input_ids, label_idxs, targets, params, alpha=0.2,
                     compute_dtype=jnp.float32):
    """TorchSpanEmo.forward (loss_type='joint', eval-mode dropout).

    Returns (loss, num_rows, logits, y_pred, targets).
    On v6e/v7x pass compute_dtype=jnp.bfloat16 to use the bf16 MXU path
    (f32 accumulation is kept inside the kernel).
    """
    B, _ = input_ids.shape
    emb, w1, b1, w2, b2 = (params["emb"], params["w1"], params["b1"],
                           params["w2"], params["b2"])
    H = emb.shape[1]
    L = label_idxs.shape[0]

    # The FFN is position-wise, so label selection commutes with it: gather
    # embeddings only at the L label positions (XLA gather; the embedding
    # table stays in HBM and never occupies VMEM).
    ids_lab = jnp.take(input_ids, label_idxs, axis=1)              # (B, L)
    x = jnp.take(emb, ids_lab, axis=0)                             # (B, L, H)
    x2 = x.reshape(B * L, H).astype(compute_dtype)                 # (B*L, H)

    w1c = w1.astype(compute_dtype)                                 # (H, H)
    b1r = b1.reshape(1, H).astype(jnp.float32)                     # (1, H)
    w2r = w2.reshape(1, H).astype(jnp.float32)                     # (H,1) -> row
    b2r = b2.reshape(1, 1).astype(jnp.float32)                     # (1, 1)
    tgt = targets.astype(jnp.float32)                              # (B, L)

    TB = _pick_batch_tile(B, L)
    grid = (B // TB,)
    kernel = make_span_emo_kernel(TB, L, H)

    logits, y_pred, partials = pl.pallas_call(
        kernel,
        grid=grid,
        in_specs=[
            pl.BlockSpec((TB * L, H), lambda i: (i, 0)),   # label-pos embeddings
            pl.BlockSpec((H, H), lambda i: (0, 0)),        # ffn W1 (grid-invariant)
            pl.BlockSpec((1, H), lambda i: (0, 0)),        # ffn b1
            pl.BlockSpec((1, H), lambda i: (0, 0)),        # ffn W2 row
            pl.BlockSpec((1, 1), lambda i: (0, 0)),        # ffn b2
            pl.BlockSpec((TB, L), lambda i: (i, 0)),       # targets
        ],
        out_specs=(
            pl.BlockSpec((TB, L), lambda i: (i, 0)),       # logits (lane-dense)
            pl.BlockSpec((TB, L), lambda i: (i, 0)),       # y_pred (lane-dense)
            pl.BlockSpec((TB, 2), lambda i: (i, 0)),       # per-row loss partials
        ),
        out_shape=(
            jax.ShapeDtypeStruct((B, L), jnp.float32),
            jax.ShapeDtypeStruct((B, L), jnp.float32),
            jax.ShapeDtypeStruct((B, 2), jnp.float32),
        ),
        compiler_params=pltpu.CompilerParams(
            dimension_semantics=("parallel",)),
    )(x2, w1c, b1r, w2r, b2r, tgt)

    # Final loss reduction over per-row partials (outside the kernel so the
    # batch axis needs no serial accumulator).
    bce_mean = jnp.sum(partials[:, 0]) / float(B * L)
    corr_mean = jnp.mean(partials[:, 1])
    loss = (1.0 - alpha) * bce_mean + alpha * corr_mean
    num_rows = B
    return loss, num_rows, logits, y_pred, targets


def reference_forward(input_ids, label_idxs, targets, params, alpha=0.2):
    emb = params["emb"][input_ids]                                   # (B, S, H)
    h = jnp.tanh(emb @ params["w1"] + params["b1"])
    full = (h @ params["w2"] + params["b2"])[..., 0]                 # (B, S)
    logits = full[:, label_idxs]                                     # (B, L)
    y_pred = (jax.nn.sigmoid(logits) > 0.5).astype(jnp.float32)
    t = targets.astype(jnp.float32)
    bce = jnp.mean(jnp.maximum(logits, 0.0) - logits * t
                   + jnp.log1p(jnp.exp(-jnp.abs(logits))))
    sig = jax.nn.sigmoid(logits)
    ones_m = (t != 0).astype(jnp.float32)
    zeros_m = 1.0 - ones_m
    s_z = jnp.sum(zeros_m * jnp.exp(sig), axis=1)
    s_o = jnp.sum(ones_m * jnp.exp(-sig), axis=1)
    n = jnp.sum(zeros_m, axis=1) * jnp.sum(ones_m, axis=1)
    corr = jnp.where(jnp.sum(ones_m, axis=1) > 0, s_z * s_o / n, 0.0)
    loss = (1.0 - alpha) * bce + alpha * jnp.mean(corr)
    return loss, logits, y_pred


if __name__ == "__main__":
    B, S, V, H, L = 2, 16, 64, 32, 8
    key = jax.random.PRNGKey(0)
    k_emb, k_w1, k_b1, k_w2, k_b2, k_ids = jax.random.split(key, 6)
    params = {
        "emb": 0.1 * jax.random.normal(k_emb, (V, H), jnp.float32),
        "w1":  0.1 * jax.random.normal(k_w1, (H, H), jnp.float32),
        "b1":  0.1 * jax.random.normal(k_b1, (1, H), jnp.float32),
        "w2":  0.1 * jax.random.normal(k_w2, (H, 1), jnp.float32),
        "b2":  0.1 * jax.random.normal(k_b2, (1, 1), jnp.float32),
    }
    input_ids = jax.random.randint(k_ids, (B, S), 0, V, dtype=jnp.int32)
    # SpanEmo places the label tokens at the start of the sequence.
    label_idxs = jnp.arange(1, L + 1, dtype=jnp.int32)
    targets = jnp.array([[1, 0, 1, 0, 0, 1, 0, 0],
                         [0, 1, 0, 0, 1, 0, 1, 1]], dtype=jnp.float32)

    loss, num_rows, logits, y_pred, tgt = span_emo_forward(
        input_ids, label_idxs, targets, params, alpha=0.2)
    jax.block_until_ready((loss, logits, y_pred))

    ref_loss, ref_logits, ref_pred = reference_forward(
        input_ids, label_idxs, targets, params, alpha=0.2)

    assert logits.shape == (B, L) and y_pred.shape == (B, L)
    assert num_rows == B
    assert jnp.allclose(logits, ref_logits, atol=1e-3, rtol=1e-3)
    assert jnp.allclose(loss, ref_loss, atol=1e-3, rtol=1e-3)
    assert jnp.array_equal(y_pred, ref_pred)
    print("KERNEL_OK")
</pallas_src>

<mosaic_0001>
module attributes {stable_mosaic.version = 11 : i64} {
  func.func @kernel(%arg0: i32, %arg1: memref<16x32xf32, #tpu.memory_space<vmem>>, %arg2: memref<32x32xf32, #tpu.memory_space<vmem>>, %arg3: memref<1x32xf32, #tpu.memory_space<vmem>>, %arg4: memref<1x32xf32, #tpu.memory_space<vmem>>, %arg5: memref<1x1xf32, #tpu.memory_space<vmem>>, %arg6: memref<2x8xf32, #tpu.memory_space<vmem>>, %arg7: memref<2x8xf32, #tpu.memory_space<vmem>>, %arg8: memref<2x8xf32, #tpu.memory_space<vmem>>, %arg9: memref<2x2xf32, #tpu.memory_space<vmem>>) attributes {dimension_semantics = [#tpu.dimension_semantics<parallel>], iteration_bounds = array<i64: 1>, scalar_prefetch = 0 : i64, scratch_operands = 0 : i64, tpu.core_type = #tpu.core_type<tc>, window_params = [{transform_indices = @transform_0, window_bounds = array<i64: 16, 32>}, {pipeline_mode = #tpu.pipeline_mode<synchronous>, transform_indices = @transform_1, window_bounds = array<i64: 32, 32>}, {pipeline_mode = #tpu.pipeline_mode<synchronous>, transform_indices = @transform_2, window_bounds = array<i64: 1, 32>}, {pipeline_mode = #tpu.pipeline_mode<synchronous>, transform_indices = @transform_3, window_bounds = array<i64: 1, 32>}, {pipeline_mode = #tpu.pipeline_mode<synchronous>, transform_indices = @transform_4, window_bounds = array<i64: 1, 1>}, {transform_indices = @transform_5, window_bounds = array<i64: 2, 8>}, {transform_indices = @transform_6, window_bounds = array<i64: 2, 8>}, {transform_indices = @transform_7, window_bounds = array<i64: 2, 8>}, {transform_indices = @transform_8, window_bounds = array<i64: 2, 2>}]} {
    %c0 = arith.constant 0 : index
    %c0_0 = arith.constant 0 : index
    %0 = vector.load %arg1[%c0, %c0_0] : memref<16x32xf32, #tpu.memory_space<vmem>>, vector<16x32xf32>
    %c0_1 = arith.constant 0 : index
    %c0_2 = arith.constant 0 : index
    %1 = vector.load %arg2[%c0_1, %c0_2] : memref<32x32xf32, #tpu.memory_space<vmem>>, vector<32x32xf32>
    %cst = arith.constant dense<0.000000e+00> : vector<16x32xf32>
    %2 = tpu.matmul %0, %1, %cst {dimension_numbers = #tpu.dot_dimension_numbers<[1], [0], [0], [1], [0, 0, 1, 1], [], []>} : vector<16x32xf32>, vector<32x32xf32>, vector<16x32xf32> -> vector<16x32xf32>
    %c0_3 = arith.constant 0 : index
    %c0_4 = arith.constant 0 : index
    %3 = vector.load %arg3[%c0_3, %c0_4] : memref<1x32xf32, #tpu.memory_space<vmem>>, vector<1x32xf32>
    %4 = vector.broadcast %3 : vector<1x32xf32> to vector<16x32xf32>
    %5 = arith.addf %2, %4 : vector<16x32xf32>
    %6 = math.tanh %5 : vector<16x32xf32>
    %c0_5 = arith.constant 0 : index
    %c0_6 = arith.constant 0 : index
    %7 = vector.load %arg4[%c0_5, %c0_6] : memref<1x32xf32, #tpu.memory_space<vmem>>, vector<1x32xf32>
    %8 = vector.broadcast %7 : vector<1x32xf32> to vector<16x32xf32>
    %9 = arith.mulf %6, %8 : vector<16x32xf32>
    %10 = vector.shape_cast %9 : vector<16x32xf32> to vector<2x8x32xf32>
    %cst_7 = arith.constant dense<0.000000e+00> : vector<2x8xf32>
    %11 = vector.multi_reduction <add>, %10, %cst_7 [2] : vector<2x8x32xf32> to vector<2x8xf32>
    %c0_8 = arith.constant 0 : index
    %c0_9 = arith.constant 0 : index
    %12 = vector.load %arg5[%c0_8, %c0_9] : memref<1x1xf32, #tpu.memory_space<vmem>>, vector<1x1xf32>
    %13 = vector.broadcast %12 : vector<1x1xf32> to vector<2x8xf32>
    %14 = arith.addf %11, %13 : vector<2x8xf32>
    %c0_10 = arith.constant 0 : index
    %c0_11 = arith.constant 0 : index
    %15 = vector.load %arg7[%c0_10, %c0_11] : memref<2x8xf32, #tpu.memory_space<vmem>>, vector<2x8xf32>
    tpu.vector_store %arg7[%c0_10, %c0_11], %14 {strides = array<i32>} : memref<2x8xf32, #tpu.memory_space<vmem>>, vector<2x8xf32>,
    %16 = arith.negf %14 : vector<2x8xf32>
    %17 = math.exp %16 : vector<2x8xf32>
    %cst_12 = arith.constant 1.000000e+00 : f32
    %18 = vector.broadcast %cst_12 : f32 to vector<2x8xf32>
    %19 = arith.addf %18, %17 : vector<2x8xf32>
    %20 = arith.divf %18, %19 : vector<2x8xf32>
    %cst_13 = arith.constant 5.000000e-01 : f32
    %21 = vector.broadcast %cst_13 : f32 to vector<2x8xf32>
    %22 = arith.cmpf ogt, %20, %21 : vector<2x8xf32>
    %23 = arith.extui %22 : vector<2x8xi1> to vector<2x8xi32>
    %24 = arith.sitofp %23 : vector<2x8xi32> to vector<2x8xf32>
    %c0_14 = arith.constant 0 : index
    %c0_15 = arith.constant 0 : index
    %25 = vector.load %arg8[%c0_14, %c0_15] : memref<2x8xf32, #tpu.memory_space<vmem>>, vector<2x8xf32>
    tpu.vector_store %arg8[%c0_14, %c0_15], %24 {strides = array<i32>} : memref<2x8xf32, #tpu.memory_space<vmem>>, vector<2x8xf32>,
    %c0_16 = arith.constant 0 : index
    %c0_17 = arith.constant 0 : index
    %26 = vector.load %arg6[%c0_16, %c0_17] : memref<2x8xf32, #tpu.memory_space<vmem>>, vector<2x8xf32>
    %cst_18 = arith.constant 0.000000e+00 : f32
    %27 = vector.broadcast %cst_18 : f32 to vector<2x8xf32>
    %28 = arith.maximumf %14, %27 : vector<2x8xf32>
    %29 = arith.mulf %14, %26 : vector<2x8xf32>
    %30 = arith.subf %28, %29 : vector<2x8xf32>
    %31 = math.absf %14 : vector<2x8xf32>
    %cst_19 = arith.constant 0.000000e+00 : f32
    %32 = vector.broadcast %cst_19 : f32 to vector<2x8xf32>
    %33 = arith.subf %32, %31 : vector<2x8xf32>
    %34 = math.exp %33 : vector<2x8xf32>
    %35 = math.log1p %34 : vector<2x8xf32>
    %36 = arith.addf %30, %35 : vector<2x8xf32>
    %cst_20 = arith.constant dense<0.000000e+00> : vector<2xf32>
    %37 = vector.multi_reduction <add>, %36, %cst_20 [1] : vector<2x8xf32> to vector<2xf32>
    %38 = vector.shape_cast %37 : vector<2xf32> to vector<2x1xf32>
    %c0_21 = arith.constant 0 : index
    %c0_22 = arith.constant 0 : index
    %39 = vector.load %arg9[%c0_21, %c0_22] : memref<2x2xf32, #tpu.memory_space<vmem>>, vector<2x1xf32>
    tpu.vector_store %arg9[%c0_21, %c0_22], %38 {strides = array<i32>} : memref<2x2xf32, #tpu.memory_space<vmem>>, vector<2x1xf32>,
    %cst_23 = arith.constant 0.000000e+00 : f32
    %40 = vector.broadcast %cst_23 : f32 to vector<2x8xf32>
    %41 = arith.cmpf one, %26, %40 : vector<2x8xf32>
    %42 = arith.extui %41 : vector<2x8xi1> to vector<2x8xi32>
    %43 = arith.sitofp %42 : vector<2x8xi32> to vector<2x8xf32>
    %cst_24 = arith.constant 1.000000e+00 : f32
    %44 = vector.broadcast %cst_24 : f32 to vector<2x8xf32>
    %45 = arith.subf %44, %43 : vector<2x8xf32>
    %46 = math.exp %20 : vector<2x8xf32>
    %47 = arith.mulf %45, %46 : vector<2x8xf32>
    %cst_25 = arith.constant dense<0.000000e+00> : vector<2xf32>
    %48 = vector.multi_reduction <add>, %47, %cst_25 [1] : vector<2x8xf32> to vector<2xf32>
    %49 = vector.shape_cast %48 : vector<2xf32> to vector<2x1xf32>
    %cst_26 = arith.constant 0.000000e+00 : f32
    %50 = vector.broadcast %cst_26 : f32 to vector<2x8xf32>
    %51 = arith.subf %50, %20 : vector<2x8xf32>
    %52 = math.exp %51 : vector<2x8xf32>
    %53 = arith.mulf %43, %52 : vector<2x8xf32>
    %cst_27 = arith.constant dense<0.000000e+00> : vector<2xf32>
    %54 = vector.multi_reduction <add>, %53, %cst_27 [1] : vector<2x8xf32> to vector<2xf32>
    %55 = vector.shape_cast %54 : vector<2xf32> to vector<2x1xf32>
    %cst_28 = arith.constant dense<0.000000e+00> : vector<2xf32>
    %56 = vector.multi_reduction <add>, %45, %cst_28 [1] : vector<2x8xf32> to vector<2xf32>
    %57 = vector.shape_cast %56 : vector<2xf32> to vector<2x1xf32>
    %cst_29 = arith.constant dense<0.000000e+00> : vector<2xf32>
    %58 = vector.multi_reduction <add>, %43, %cst_29 [1] : vector<2x8xf32> to vector<2xf32>
    %59 = vector.shape_cast %58 : vector<2xf32> to vector<2x1xf32>
    %cst_30 = arith.constant 0.000000e+00 : f32
    %60 = vector.broadcast %cst_30 : f32 to vector<2x1xf32>
    %61 = arith.cmpf ogt, %59, %60 : vector<2x1xf32>
    %62 = arith.mulf %49, %55 : vector<2x1xf32>
    %63 = arith.mulf %57, %59 : vector<2x1xf32>
    %64 = arith.divf %62, %63 : vector<2x1xf32>
    %cst_31 = arith.constant 0.000000e+00 : f32
    %65 = vector.broadcast %cst_31 : f32 to vector<2x1xf32>
    %66 = arith.select %61, %64, %65 : vector<2x1xi1>, vector<2x1xf32>
    %c0_32 = arith.constant 0 : index
    %c1 = arith.constant 1 : index
    %67 = vector.load %arg9[%c0_32, %c1] : memref<2x2xf32, #tpu.memory_space<vmem>>, vector<2x1xf32>
    tpu.vector_store %arg9[%c0_32, %c1], %66 {strides = array<i32>} : memref<2x2xf32, #tpu.memory_space<vmem>>, vector<2x1xf32>,
    return
  }
  func.func @transform_0(%arg0: i32) -> (i32, i32) {
    %c0_i32 = arith.constant 0 : i32
    %c0_i32_0 = arith.constant 0 : i32
    return %arg0, %c0_i32 : i32, i32
  }
  func.func @transform_1(%arg0: i32) -> (i32, i32) {
    %c0_i32 = arith.constant 0 : i32
    %c0_i32_0 = arith.constant 0 : i32
    %c0_i32_1 = arith.constant 0 : i32
    return %c0_i32, %c0_i32_0 : i32, i32
  }
  func.func @transform_2(%arg0: i32) -> (i32, i32) {
    %c0_i32 = arith.constant 0 : i32
    %c0_i32_0 = arith.constant 0 : i32
    %c0_i32_1 = arith.constant 0 : i32
    return %c0_i32, %c0_i32_0 : i32, i32
  }
  func.func @transform_3(%arg0: i32) -> (i32, i32) {
    %c0_i32 = arith.constant 0 : i32
    %c0_i32_0 = arith.constant 0 : i32
    %c0_i32_1 = arith.constant 0 : i32
    return %c0_i32, %c0_i32_0 : i32, i32
  }
  func.func @transform_4(%arg0: i32) -> (i32, i32) {
    %c0_i32 = arith.constant 0 : i32
    %c0_i32_0 = arith.constant 0 : i32
    %c0_i32_1 = arith.constant 0 : i32
    return %c0_i32, %c0_i32_0 : i32, i32
  }
  func.func @transform_5(%arg0: i32) -> (i32, i32) {
    %c0_i32 = arith.constant 0 : i32
    %c0_i32_0 = arith.constant 0 : i32
    return %arg0, %c0_i32 : i32, i32
  }
  func.func @transform_6(%arg0: i32) -> (i32, i32) {
    %c0_i32 = arith.constant 0 : i32
    %c0_i32_0 = arith.constant 0 : i32
    return %arg0, %c0_i32 : i32, i32
  }
  func.func @transform_7(%arg0: i32) -> (i32, i32) {
    %c0_i32 = arith.constant 0 : i32
    %c0_i32_0 = arith.constant 0 : i32
    return %arg0, %c0_i32 : i32, i32
  }
  func.func @transform_8(%arg0: i32) -> (i32, i32) {
    %c0_i32 = arith.constant 0 : i32
    %c0_i32_0 = arith.constant 0 : i32
    return %arg0, %c0_i32 : i32, i32
  }
}

</mosaic_0001>

<llo_original>
// kernel: tpu_custom_call.1
$region0: #{tpu_custom_call.1}
  #allocation0 [shape = 'u32[]', space=smem, size = 0x4, offset = 0x4, fixed_abs, tag = 'smem constant byte address 0x4 - core index']
  #allocation1 [shape = 'u32[144,128]{1,0:T(1,128)}', space=vmem, size = 0x12000, scoped, tag = 'internal scratch']
  #allocation2 [shape = 'f32[1,1]{1,0:T(1,128)S(1)}', space=vmem, size = 0x200, scoped, tag = 'scoped memory for tpu_custom_call.1']
  %s0 = inlined_call_operand.hbm [shape: f32[16,32], index: 0, kind: input, shape index: {}]
  %s1 = inlined_call_operand.hbm [shape: f32[32,32], index: 1, kind: input, shape index: {}]
  %s2 = inlined_call_operand.vmem [shape: f32[1,32], index: 2, kind: input, shape index: {}]
  %s3 = inlined_call_operand.vmem [shape: f32[1,32], index: 3, kind: input, shape index: {}]
  %s4 = inlined_call_operand.<no memory space> [shape: f32[1,1], index: 4, kind: input, shape index: {}]
  %s5 = inlined_call_operand.vmem [shape: f32[2,8], index: 5, kind: input, shape index: {}]
  %s6 = inlined_call_operand.hbm [shape: f32[2,8], index: 6, kind: output, shape index: {0}]
  %s7 = inlined_call_operand.hbm [shape: f32[2,8], index: 7, kind: output, shape index: {1}]
  %s8 = inlined_call_operand.hbm [shape: f32[2,2], index: 8, kind: output, shape index: {2}]
  %9 = xla_tuple %s6, %s7, %s8
  %s10 = sld [smem:[#allocation0]]
  $region58: #{tpu_custom_call.1} parent=0
    _
  %s12 = ssub.s32 1, %s10
  %s13 = scalar_select 0, %s12, %s10
  %v14 = vstv %s4
  %15 = vst [vmem:[#allocation2] sm:$0x1] %v14
  $region1: #{tpu_custom_call.1} parent=0
    #allocation3 [shape = 'u8[8192]{0}', space=vmem, size = 0x2000, scoped, tag = 'input window, operand 0, single buffered']
    #allocation4 [shape = 's32[1]{0}', space=sflag, size = 0x4, scoped, tag = 'scoped memory for tpu_custom_call.1']
    #allocation5 [shape = 's32[1]{0}', space=sflag, size = 0x4, scoped, tag = 'scoped memory for tpu_custom_call.1']
    #allocation6 [shape = 'u8[16384]{0}', space=vmem, size = 0x4000, scoped, tag = 'input window, operand 1, single buffered']
    #allocation7 [shape = 's32[1]{0}', space=sflag, size = 0x4, scoped, tag = 'scoped memory for tpu_custom_call.1']
    #allocation8 [shape = 'u8[1024]{0}', space=vmem, size = 0x400, scoped, tag = 'output window, operand 0, single buffered']
    #allocation9 [shape = 'u8[1024]{0}', space=vmem, size = 0x400, scoped, tag = 'output window, operand 1, single buffered']
    #allocation10 [shape = 's32[1]{0}', space=sflag, size = 0x4, scoped, tag = 'scoped memory for tpu_custom_call.1']
    #allocation11 [shape = 'u8[1024]{0}', space=vmem, size = 0x400, scoped, tag = 'output window, operand 2, single buffered']
    %16 = vsyncpa [#allocation4], 0
    %17 = vsyncpa [#allocation7], 0
    %18 = vsyncpa [#allocation5], 0
    %19 = vsyncpa [#allocation10], 0
    // Predicated region
    $region2: #{tpu_custom_call.1} parent=1 // pred_check
      _
    $region3: #{tpu_custom_call.1} parent=1 // pred_check_branch
      %21 = sbr.rel (0) target = $region5
    $region4: #{tpu_custom_call.1} parent=1 // pred_region
      %s23 = ssub.s32 256, 256
      %24 = vsyncadd [#allocation4], %s23
      %s25 = sshll.u32 [#allocation3], 4
      %s26 = int_to_ptr.vmem [resolvable:$true] %s25
      %31 = dma.hbm_to_vmem [thread:$0]  %s0, 256, %s26, [#allocation4], 128, 128, 8
    $region5: #{tpu_custom_call.1} parent=1 // pred_fallthru
      _
    // Predicated region
    $region6: #{tpu_custom_call.1} parent=1 // pred_check
      _
    $region7: #{tpu_custom_call.1} parent=1 // pred_check_branch
      %33 = sbr.rel (0) target = $region9
    $region8: #{tpu_custom_call.1} parent=1 // pred_region
      %s35 = ssub.s32 512, 512
      %36 = vsyncadd [#allocation7], %s35
      %s37 = sshll.u32 [#allocation6], 4
      %s38 = int_to_ptr.vmem [resolvable:$true] %s37
      %43 = dma.hbm_to_vmem [thread:$0]  %s1, 512, %s38, [#allocation7], 128, 128, 8
    $region9: #{tpu_custom_call.1} parent=1 // pred_fallthru
      _
    // Predicated region
    $region10: #{tpu_custom_call.1} parent=1 // pred_check
      _
    $region11: #{tpu_custom_call.1} parent=1 // pred_check_branch
      %45 = sbr.rel (0) target = $region13
    $region12: #{tpu_custom_call.1} parent=1 // pred_region
      _
    $region13: #{tpu_custom_call.1} parent=1 // pred_fallthru
      _
    // Predicated region
    $region14: #{tpu_custom_call.1} parent=1 // pred_check
      _
    $region15: #{tpu_custom_call.1} parent=1 // pred_check_branch
      %47 = sbr.rel (0) target = $region17
    $region16: #{tpu_custom_call.1} parent=1 // pred_region
      _
    $region17: #{tpu_custom_call.1} parent=1 // pred_fallthru
      _
    // Predicated region
    $region18: #{tpu_custom_call.1} parent=1 // pred_check
      _
    $region19: #{tpu_custom_call.1} parent=1 // pred_check_branch
      %49 = sbr.rel (0) target = $region21
    $region20: #{tpu_custom_call.1} parent=1 // pred_region
      _
    $region21: #{tpu_custom_call.1} parent=1 // pred_fallthru
      _
    // Predicated region
    $region22: #{tpu_custom_call.1} parent=1 // pred_check
      _
    $region23: #{tpu_custom_call.1} parent=1 // pred_check_branch
      %51 = sbr.rel (0) target = $region25
    $region24: #{tpu_custom_call.1} parent=1 // pred_region
      _
    $region25: #{tpu_custom_call.1} parent=1 // pred_fallthru
      _
    // Predicated region
    $region26: #{tpu_custom_call.1} parent=1 // pred_check
      _
    $region27: #{tpu_custom_call.1} parent=1 // pred_check_branch
      %53 = sbr.rel (0) target = $region29
    $region28: #{tpu_custom_call.1} parent=1 // pred_region
      %54 = dma.done [#allocation4], 256
    $region29: #{tpu_custom_call.1} parent=1 // pred_fallthru
      _
    // Predicated region
    $region30: #{tpu_custom_call.1} parent=1 // pred_check
      _
    $region31: #{tpu_custom_call.1} parent=1 // pred_check_branch
      %56 = sbr.rel (0) target = $region33
    $region32: #{tpu_custom_call.1} parent=1 // pred_region
      %57 = dma.done [#allocation7], 512
    $region33: #{tpu_custom_call.1} parent=1 // pred_fallthru
      _
    %v58 = vld [vmem:[#allocation3] sm:$0xff]
    %v59 = vld [vmem:[#allocation3 + $0x8] sm:$0xff]
    %v60 = vld [vmem:[#allocation6] sm:$0xff]
    %v61 = vld [vmem:[#allocation6 + $0x8] sm:$0xff]
    %v62 = vld [vmem:[#allocation6 + $0x10] sm:$0xff]
    %v63 = vld [vmem:[#allocation6 + $0x18] sm:$0xff]
    %v64 = vld [vmem:[%s2] sm:$0x1]
    %v66 = vlaneseq
    %v67 = vshrl.u32 %v66, 7
    %v68 = vsub.s32 0, %v67
    %v69 = vrot.slane %v64, %v68
    %vm71 = vcmask 261120
    %v73 = vsel %vm71, %v58, 0
    %v76 = vsel %vm71, %v59, 0
    %78 = vmatprep.subr.mxu0 0.0
    %79 = vmatpush1.msra.mxu0 %v60
    %80 = vmatprep.subr.mxu0 0.0
    %81 = vmatpush1.msra.mxu0 %v61
    %82 = vmatprep.subr.mxu0 0.0
    %83 = vmatpush1.msra.mxu0 %v62
    %84 = vmatprep.subr.mxu0 0.0
    %85 = vmatpush1.msra.mxu0 %v63
    %86 = vmatprep.subr.mxu0 0.0
    %87 = vmatpush1.msra.mxu0 0.0
    %88 = vmatprep.subr.mxu0 0.0
    %89 = vmatpush1.msra.mxu0 0.0
    %90 = vmatprep.subr.mxu0 0.0
    %91 = vmatpush1.msra.mxu0 0.0
    %92 = vmatprep.subr.mxu0 0.0
    %93 = vmatpush1.msra.mxu0 0.0
    %94 = vmatprep.subr.mxu0 0.0
    %95 = vmatpush1.msra.mxu0 0.0
    %96 = vmatprep.subr.mxu0 0.0
    %97 = vmatpush1.msra.mxu0 0.0
    %98 = vmatprep.subr.mxu0 0.0
    %99 = vmatpush1.msra.mxu0 0.0
    %100 = vmatprep.subr.mxu0 0.0
    %101 = vmatpush1.msra.mxu0 0.0
    %102 = vmatprep.subr.mxu0 0.0
    %103 = vmatpush1.msra.mxu0 0.0
    %104 = vmatprep.subr.mxu0 0.0
    %105 = vmatpush1.msra.mxu0 0.0
    %106 = vmatprep.subr.mxu0 0.0
    %107 = vmatpush1.msra.mxu0 0.0
    %108 = vmatprep.subr.mxu0 0.0
    %109 = vmatpush1.msra.mxu0 0.0
    %110 = vmatprep.subr.mxu0 0.0
    %111 = vmatpush1.msra.mxu0 0.0
    %112 = vmatprep.subr.mxu0 0.0
    %113 = vmatpush1.msra.mxu0 0.0
    %114 = vmatprep.subr.mxu0 0.0
    %115 = vmatpush1.msra.mxu0 0.0
    %116 = vmatprep.subr.mxu0 0.0
    %117 = vmatpush1.msra.mxu0 0.0
    %118 = vmatprep.subr.mxu0 0.0
    %119 = vmatpush1.msra.mxu0 0.0
    %120 = vmatprep.subr.mxu0 0.0
    %121 = vmatpush1.msra.mxu0 0.0
    %122 = vmatprep.subr.mxu0 0.0
    %123 = vmatpush1.msra.mxu0 0.0
    %124 = vmatprep.subr.mxu0 0.0
    %125 = vmatpush1.msra.mxu0 0.0
    %126 = vmatprep.subr.mxu0 0.0
    %127 = vmatpush1.msra.mxu0 0.0
    %128 = vmatprep.subr.mxu0 0.0
    %129 = vmatpush1.msra.mxu0 0.0
    %130 = vmatprep.subr.mxu0 0.0
    %131 = vmatpush1.msra.mxu0 0.0
    %132 = vmatprep.subr.mxu0 0.0
    %133 = vmatpush1.msra.mxu0 0.0
    %134 = vmatprep.subr.mxu0 0.0
    %135 = vmatpush1.msra.mxu0 0.0
    %136 = vmatprep.subr.mxu0 0.0
    %137 = vmatpush1.msra.mxu0 0.0
    %138 = vmatprep.subr.mxu0 0.0
    %139 = vmatpush1.msra.mxu0 0.0
    %140 = vmatprep.subr.mxu0 0.0
    %141 = vmatpush1.msra.mxu0 0.0
    %142 = vmatprep.mubr.f32.mxu0 0.0
    %143 = vmatmul.mubr.f32.gmra.mrb[0].mxu0 %v73
    %v144 = vpop.f32.mrb[0].mxu0
    %v145 = vadd.f32 %v69, %v144
    %v146 = vpop.f32.mrb[0].mxu0
    %147 = vmatprep.mubr.f32.mxu0 0.0
    %148 = vmatmul.mubr.f32.gmra.mrb[0].mxu0 %v76
    %v149 = vpop.f32.mrb[0].mxu0
    %v150 = vadd.f32 %v69, %v149
    %v151 = vpop.f32.mrb[0].mxu0
    %152 = vdwg.mxu0
    %v153 = vtanh.pop %v145
    %v154 = vtanh.pop %v150
    %v155 = vld [vmem:[%s3] sm:$0x1]
    %v157 = vlaneseq
    %v158 = vshrl.u32 %v157, 7
    %v159 = vsub.s32 0, %v158
    %v160 = vrot.slane %v155, %v159
    %v162 = vmul.f32 %v153, %v160
    %v163 = vmul.f32 %v154, %v160
    %v164 = vsel %vm71, %v162, 0.0
    %165 = vadd.xlane.f32.xlu0 %v164
    %v166 = vpop.xlane.xlu0 %165
    %v167 = vsel %vm71, %v163, 0.0
    %168 = vadd.xlane.f32.xlu0 %v167
    %v169 = vpop.xlane.xlu0 %168
    %v170 = vld [vmem:[#allocation2] sm:$0x1]
    %v172 = vlaneseq
    %v173 = vshrl.u32 %v172, 7
    %v174 = vsub.s32 0, %v173
    %v175 = vrot.slane %v170, %v174
    %176 = vset.pattern.permute.xlu0 0
    %177 = vperm.xlu0 %176, %v175
    %v178 = vpop.permute.xlu0 %177
    %v180 = vadd.f32 %v166, %v178
    %v181 = vadd.f32 %v169, %v178
    %v184 = vlaneseq
    %v185 = vand.u32 %v184, 127
    %v186 = vlaneseq
    %v187 = vshrl.u32 %v186, 7
    %v188 = vsub.s32 %v185, %v187
    %v189 = vrot.slane %v180, %v188
    %v190 = vlaneseq
    %v191 = vshrl.u32 %v190, 7
    %v192 = vsub.s32 %v185, %v191
    %v193 = vrot.slane %v181, %v192
    %vm194 = vcmask 1041409
    %v195 = vsel %vm194, %v193, %v189
    %vm197 = vcmask 58368
    %198 = vst.msk [vmem:[#allocation8] sm:$0x3] %vm197, %v195
    %v199 = vxor.u32 %v180, 2147483648
    %v200 = vxor.u32 %v181, 2147483648
    %v201 = vmul.f32 %v199, 1.442695
    %v202 = vpow.pop %v201
    %v203 = vmul.f32 %v200, 1.442695
    %v204 = vpow.pop %v203
    %v205 = vadd.f32 %v202, 1.0
    %v206 = vadd.f32 %v204, 1.0
    %v207 = vrcp.pop %v205
    %v208 = vmul.f32 1.0, %v207
    %v209 = vrcp.pop %v206
    %v210 = vmul.f32 1.0, %v209
    %vm211 = vcmp.gt.f32.partialorder %v208, 0.5
    %vm212 = vcmp.gt.f32.partialorder %v210, 0.5
    %v213 = vsel %vm211, 1, 0
    %v214 = vsel %vm212, 1, 0
    %v215 = vcvt.s32.f32 %v213
    %v216 = vcvt.s32.f32 %v214
    %v219 = vlaneseq
    %v220 = vshrl.u32 %v219, 7
    %v221 = vsub.s32 %v185, %v220
    %v222 = vrot.slane %v215, %v221
    %v223 = vlaneseq
    %v224 = vshrl.u32 %v223, 7
    %v225 = vsub.s32 %v185, %v224
    %v226 = vrot.slane %v216, %v225
    %v227 = vsel %vm194, %v226, %v222
    %229 = vst.msk [vmem:[#allocation9] sm:$0x3] %vm197, %v227
    %v230 = vld [vmem:[%s5] sm:$0x3]
    %v231 = vmax.f32 %v180, 0.0
    %v232 = vmax.f32 %v181, 0.0
    %v234 = vlaneseq
    %v235 = vshrl.u32 %v234, 7
    %v236 = vsub.s32 0, %v235
    %v237 = vrot.slane %v230, %v236
    %239 = vbcast.lane.b32.xlu0 %v237, 256
    %v240 = vpop.permute.xlu0 %239
    %v241 = vlaneseq
    %v242 = vshrl.u32 %v241, 7
    %v243 = vsub.s32 1, %v242
    %v244 = vrot.slane %v230, %v243
    %246 = vbcast.lane.b32.xlu0 %v244, 256
    %v247 = vpop.permute.xlu0 %246
    %v250 = vmul.f32 %v180, %v240
    %v251 = vmul.f32 %v181, %v247
    %v252 = vsub.f32 %v231, %v250
    %v253 = vsub.f32 %v232, %v251
    %v254 = vand.u32 2147483647, %v180
    %v255 = vand.u32 2147483647, %v181
    %v256 = vsub.f32 0.0, %v254
    %v257 = vsub.f32 0.0, %v255
    %v258 = vmul.f32 %v256, 1.442695
    %v259 = vpow.pop %v258
    %v260 = vmul.f32 %v257, 1.442695
    %v261 = vpow.pop %v260
    %v262 = vadd.f32 %v259, 1.0
    %v263 = vlog2.pop %v262
    %v264 = vmul.f32 %v263, 0.6931472
    %v265 = vmul.f32 -0.5, %v259
    %v266 = vadd.f32 %v265, 1.0
    %v267 = vmul.f32 %v266, %v259
    %v268 = vand.u32 2147483647, %v259
    %vm269 = vcmp.lt.f32.partialorder %v268, 0.0004427343
    %v270 = vsel %vm269, %v267, %v264
    %v271 = vadd.f32 %v261, 1.0
    %v272 = vlog2.pop %v271
    %v273 = vmul.f32 %v272, 0.6931472
    %v274 = vmul.f32 -0.5, %v261
    %v275 = vadd.f32 %v274, 1.0
    %v276 = vmul.f32 %v275, %v261
    %v277 = vand.u32 2147483647, %v261
    %vm278 = vcmp.lt.f32.partialorder %v277, 0.0004427343
    %v279 = vsel %vm278, %v276, %v273
    %v280 = vadd.f32 %v252, %v270
    %v281 = vadd.f32 %v253, %v279
    %284 = vset.pattern.permute.xlu0 0
    %285 = vperm.xlu0 %284, %v280
    %v286 = vpop.permute.xlu0 %285
    %287 = vset.pattern.permute.xlu0 0
    %288 = vperm.xlu0 %287, %v281
    %v289 = vpop.permute.xlu0 %288
    %v290 = vlaneseq
    %v291 = vshrl.u32 %v290, 7
    %v292 = vsub.s32 %v185, %v291
    %v293 = vrot.slane %v286, %v292
    %v294 = vlaneseq
    %v295 = vshrl.u32 %v294, 7
    %v296 = vsub.s32 %v185, %v295
    %v297 = vrot.slane %v289, %v296
    %v298 = vsel %vm194, %v297, %v293
    %v300 = vsel %vm197, %v298, 0.0
    %301 = vadd.xlane.f32.xlu0 %v300
    %v302 = vpop.xlane.xlu0 %301
    %vm303 = vcmask 1024
    %304 = vst.msk [vmem:[#allocation11] sm:$0x3] %vm303, %v302
    %vm305 = vcmp.ne.f32.partialorder %v230, 0.0
    %v306 = vsel %vm305, 1, 0
    %v307 = vcvt.s32.f32 %v306
    %v308 = vsub.f32 1.0, %v307
    %v309 = vmul.f32 %v208, 1.442695
    %v310 = vpow.pop %v309
    %v311 = vmul.f32 %v210, 1.442695
    %v312 = vpow.pop %v311
    %v315 = vlaneseq
    %v316 = vshrl.u32 %v315, 7
    %v317 = vsub.s32 %v185, %v316
    %v318 = vrot.slane %v310, %v317
    %v319 = vlaneseq
    %v320 = vshrl.u32 %v319, 7
    %v321 = vsub.s32 %v185, %v320
    %v322 = vrot.slane %v312, %v321
    %v323 = vsel %vm194, %v322, %v318
    %v325 = vmul.f32 %v308, %v323
    %v326 = vsel %vm197, %v325, 0.0
    %327 = vadd.xlane.f32.xlu0 %v326
    %v328 = vpop.xlane.xlu0 %327
    %v329 = vsub.f32 0.0, %v208
    %v330 = vsub.f32 0.0, %v210
    %v331 = vmul.f32 %v329, 1.442695
    %v332 = vpow.pop %v331
    %v333 = vmul.f32 %v330, 1.442695
    %v334 = vpow.pop %v333
    %v337 = vlaneseq
    %v338 = vshrl.u32 %v337, 7
    %v339 = vsub.s32 %v185, %v338
    %v340 = vrot.slane %v332, %v339
    %v341 = vlaneseq
    %v342 = vshrl.u32 %v341, 7
    %v343 = vsub.s32 %v185, %v342
    %v344 = vrot.slane %v334, %v343
    %v345 = vsel %vm194, %v344, %v340
    %v347 = vmul.f32 %v307, %v345
    %v348 = vsel %vm197, %v347, 0.0
    %349 = vadd.xlane.f32.xlu0 %v348
    %v350 = vpop.xlane.xlu0 %349
    %v351 = vsel %vm197, %v308, 0.0
    %352 = vadd.xlane.f32.xlu0 %v351
    %v353 = vpop.xlane.xlu0 %352
    %v354 = vsel %vm197, %v307, 0.0
    %355 = vadd.xlane.f32.xlu0 %v354
    %v356 = vpop.xlane.xlu0 %355
    %vm357 = vcmp.gt.f32.partialorder %v356, 0.0
    %v358 = vmul.f32 %v328, %v350
    %v359 = vmul.f32 %v353, %v356
    %v360 = vrcp.pop %v359
    %v361 = vmul.f32 %v358, %v360
    %v362 = vsel %vm357, %v361, 0.0
    %vm363 = vcmask 9224
    %364 = vst.msk [vmem:[#allocation11] sm:$0x3] %vm363, %v362
    // Predicated region
    $region34: #{tpu_custom_call.1} parent=1 // pred_check
      _
    $region35: #{tpu_custom_call.1} parent=1 // pred_check_branch
      %366 = sbr.rel (0) target = $region37
    $region36: #{tpu_custom_call.1} parent=1 // pred_region
      %s368 = ssub.s32 32, 32
      %369 = vsyncadd [#allocation5], %s368
      %s371 = sshll.u32 [#allocation8], 4
      %s372 = int_to_ptr.vmem [resolvable:$true] %s371
      %374 = dma.vmem_to_hbm [thread:$0]  %s372, 32, %s6, [#allocation5]
    $region37: #{tpu_custom_call.1} parent=1 // pred_fallthru
      _
    // Predicated region
    $region38: #{tpu_custom_call.1} parent=1 // pred_check
      _
    $region39: #{tpu_custom_call.1} parent=1 // pred_check_branch
      %376 = sbr.rel (0) target = $region41
    $region40: #{tpu_custom_call.1} parent=1 // pred_region
      %s378 = ssub.s32 32, 32
      %379 = vsyncadd [#allocation10], %s378
      %s381 = sshll.u32 [#allocation9], 4
      %s382 = int_to_ptr.vmem [resolvable:$true] %s381
      %384 = dma.vmem_to_hbm [thread:$0]  %s382, 32, %s7, [#allocation10]
    $region41: #{tpu_custom_call.1} parent=1 // pred_fallthru
      _
    // Predicated region
    $region42: #{tpu_custom_call.1} parent=1 // pred_check
      _
    $region43: #{tpu_custom_call.1} parent=1 // pred_check_branch
      %386 = sbr.rel (0) target = $region45
    $region44: #{tpu_custom_call.1} parent=1 // pred_region
      %s388 = ssub.s32 32, 32
      %389 = vsyncadd [#allocation10], %s388
      %s391 = sshll.u32 [#allocation11], 4
      %s392 = int_to_ptr.vmem [resolvable:$true] %s391
      %394 = dma.vmem_to_hbm [thread:$0]  %s392, 32, %s8, [#allocation10]
    $region45: #{tpu_custom_call.1} parent=1 // pred_fallthru
      _
    // Predicated region
    $region46: #{tpu_custom_call.1} parent=1 // pred_check
      _
    $region47: #{tpu_custom_call.1} parent=1 // pred_check_branch
      %396 = sbr.rel (0) target = $region49
    $region48: #{tpu_custom_call.1} parent=1 // pred_region
      %397 = dma.done [#allocation5], 32
    $region49: #{tpu_custom_call.1} parent=1 // pred_fallthru
      _
    // Predicated region
    $region50: #{tpu_custom_call.1} parent=1 // pred_check
      _
    $region51: #{tpu_custom_call.1} parent=1 // pred_check_branch
      %399 = sbr.rel (0) target = $region53
    $region52: #{tpu_custom_call.1} parent=1 // pred_region
      %400 = dma.done [#allocation10], 32
    $region53: #{tpu_custom_call.1} parent=1 // pred_fallthru
      _
    // Predicated region
    $region54: #{tpu_custom_call.1} parent=1 // pred_check
      _
    $region55: #{tpu_custom_call.1} parent=1 // pred_check_branch
      %402 = sbr.rel (0) target = $region57
    $region56: #{tpu_custom_call.1} parent=1 // pred_region
      %403 = dma.done [#allocation10], 32
    $region57: #{tpu_custom_call.1} parent=1 // pred_fallthru
      _
    %404 = vsyncpa [#allocation4], 1
    %405 = vsyncpa [#allocation7], 1
    %406 = vsyncpa [#allocation5], 1
    %407 = vsyncpa [#allocation10], 1

</llo_original>
